<compile_context>
chip_gen: v5e
topology: v5e:2x2
jax: 0.10.0
libtpu: 0.0.40
codegen_flags: <defaults>
</compile_context>

<pallas_src>
import numpy as np
import jax
import jax.numpy as jnp
from jax.experimental import pallas as pl
from jax.experimental.pallas import tpu as pltpu

SLOTS = 8          # fixed fan-in of 2x2x2 / stride-2 sparse max pooling
RL = 128           # lane-dense width of the fused [px*c, py*c, pz*c, c, 0...] slab
COUNT_COL = 3      # lane holding the summed counts inside the RL-wide slab
NEG_BIG = -3.0e38  # large-negative sentinel instead of -inf (avoids inf/NaN edge cases)


def _round_up(x, m):
    return ((x + m - 1) // m) * m


def _pick_tile(num_out):
    """Output-row tile: multiple of 8, <=128, and >=2 tiles when num_out allows (v7x megacore)."""
    if num_out >= 256:
        return 128
    half = _round_up(max((num_out + 1) // 2, 1), 8)
    return int(min(128, max(8, half)))


def _pool_slots_kernel(feat_ref, rhs_ref, of_ref, opc_ref):
    # feat_ref: (SLOTS, TM, Cp) f32  slot-major gathered features (sentinel slots = NEG_BIG)
    # rhs_ref:  (SLOTS, TM, RL) f32  slot-major [px*c, py*c, pz*c, c, 0...] (sentinel slots = 0)
    # of_ref:   (TM, Cp) f32  max-pooled features of this output tile
    # opc_ref:  (TM, RL) f32  [cx, cy, cz, count_sum, 0...]
    fmax = feat_ref[0]
    psum = rhs_ref[0]
    for s in range(1, SLOTS):                       # static unroll: SLOTS-1 vectorized passes
        fmax = jnp.maximum(fmax, feat_ref[s])
        psum = psum + rhs_ref[s]

    den = psum[:, COUNT_COL:COUNT_COL + 1]          # (TM, 1) summed counts
    valid = den > 0.0                               # padded output rows have no inputs
    safe = jnp.where(valid, den, 1.0)
    col = jax.lax.broadcasted_iota(jnp.int32, psum.shape, 1)
    divisor = jnp.where(col == COUNT_COL, 1.0, safe)  # keep the raw count column un-divided
    opc_ref[...] = jnp.where(valid, psum / divisor, 0.0)
    of_ref[...] = jnp.where(valid, fmax, 0.0).astype(of_ref.dtype)


def maxpool_with_points(feats, points, counts_f, gather_idx, num_out, m_pad, tm):
    """feats (N,C) f32, points (N,3) f32, counts_f (N,) f32,
    gather_idx (SLOTS, m_pad) int32 with values in [0, N]; N == sentinel (empty slot)."""
    n, c = feats.shape
    c_pad = _round_up(max(c, 1), 128)

    # Sentinel row n: NEG_BIG features (neutral for max), zero rhs (neutral for sums).
    feats_ext = jnp.full((n + 1, c_pad), NEG_BIG, jnp.float32)
    feats_ext = feats_ext.at[:n, :c].set(feats.astype(jnp.float32))
    rhs_ext = jnp.zeros((n + 1, RL), jnp.float32)
    rhs_ext = rhs_ext.at[:n, 0:3].set(points.astype(jnp.float32) * counts_f[:, None])
    rhs_ext = rhs_ext.at[:n, COUNT_COL].set(counts_f)

    # One slot-major row gather (layout plumbing by XLA; indices come from the host-side
    # np.unique the coordinate manager already pays for).  After this, the kernel's access
    # pattern is purely rectangular and streams O(8*M) rows total -- independent of how many
    # output tiles there are (vs. the previous O(N * M/TM) scan).
    flat = gather_idx.reshape(-1)
    feat_slots = jnp.take(feats_ext, flat, axis=0).reshape(SLOTS, m_pad, c_pad)
    rhs_slots = jnp.take(rhs_ext, flat, axis=0).reshape(SLOTS, m_pad, RL)

    of, opc = pl.pallas_call(
        _pool_slots_kernel,
        out_shape=(
            jax.ShapeDtypeStruct((m_pad, c_pad), jnp.float32),   # pooled features
            jax.ShapeDtypeStruct((m_pad, RL), jnp.float32),      # [cx, cy, cz, count_sum, 0...]
        ),
        grid=(m_pad // tm,),
        in_specs=[
            pl.BlockSpec((SLOTS, tm, c_pad), lambda i: (0, i, 0)),
            pl.BlockSpec((SLOTS, tm, RL), lambda i: (0, i, 0)),
        ],
        out_specs=[
            pl.BlockSpec((tm, c_pad), lambda i: (i, 0)),
            pl.BlockSpec((tm, RL), lambda i: (i, 0)),
        ],
        compiler_params=pltpu.CompilerParams(
            dimension_semantics=("parallel",),          # output tiles shard across TCs (v7x)
            vmem_limit_bytes=32 * 1024 * 1024,          # safe on v5e/v6e/v7x; footprint is a few MiB
        ),
    )(feat_slots, rhs_slots)

    down_feats = of[:num_out, :c]
    down_points = opc[:num_out, 0:3]
    # Count sums accumulate in f32 over <=8 integer-valued addends: exact while the per-output
    # summed count stays <= 2^24 (always true for realistic voxel counts).
    down_counts = jnp.round(opc[:num_out, COUNT_COL]).astype(jnp.int32)
    return down_feats, down_points, down_counts


def forward_maxpool_with_points(coords, feats, points, counts):
    """Full MaxPoolWithPoints.forward equivalent.

    coords: (N,4) int [batch, x, y, z]; feats (N,C); points (N,3); counts (N,) int.
    Returns (down_coords, down_feats, down_points, down_counts).
    """
    # TODO(synk): MinkowskiEngine coordinate_manager / stride_map is CPU hash-map bookkeeping
    # (and forces a host sync); the unique/inverse + slot-table construction below is the
    # numpy equivalent and stays on the host.
    coords_np = np.asarray(coords)
    n = coords_np.shape[0]
    down_np = coords_np.copy()
    down_np[:, 1:] = (down_np[:, 1:] // 2) * 2  # output coords at tensor_stride 2
    uniq, inv = np.unique(down_np, axis=0, return_inverse=True)
    inv = np.asarray(inv).reshape(-1).astype(np.int64)
    num_out = int(uniq.shape[0])

    # Build the (SLOTS, M_pad) slot table: slot s of output r = input row index, or n (sentinel).
    order = np.argsort(inv, kind="stable")
    sorted_inv = inv[order]
    seg_sizes = np.bincount(inv, minlength=num_out)
    seg_start = np.zeros(num_out + 1, np.int64)
    seg_start[1:] = np.cumsum(seg_sizes)
    pos_in_seg = np.arange(n, dtype=np.int64) - seg_start[sorted_inv]
    assert int(pos_in_seg.max(initial=0)) < SLOTS, \
        "fan-in > 8: inputs are not a valid 2x2x2 / stride-2 pooling map"

    tm = _pick_tile(num_out)
    m_pad = _round_up(max(num_out, 1), tm)
    gather = np.full((SLOTS, m_pad), n, dtype=np.int32)
    gather[pos_in_seg, sorted_inv] = order.astype(np.int32)
    gather_idx = jnp.asarray(gather)

    counts_f = jnp.asarray(counts).astype(jnp.float32)
    down_feats, down_points, down_counts = maxpool_with_points(
        jnp.asarray(feats), jnp.asarray(points), counts_f, gather_idx, num_out, m_pad, tm)
    return jnp.asarray(uniq), down_feats, down_points, down_counts


if __name__ == "__main__":
    key = jax.random.PRNGKey(0)
    k1, k2, k3, k4, k5 = jax.random.split(key, 5)

    N, C = 64, 16
    batch = jax.random.randint(k1, (N, 1), 0, 2, dtype=jnp.int32)
    xyz = jax.random.randint(k2, (N, 3), 0, 8, dtype=jnp.int32)
    coords = jnp.concatenate([batch, xyz], axis=1)              # (N, 4)
    feats = jax.random.normal(k3, (N, C), dtype=jnp.float32)    # (N, C)
    points = jax.random.normal(k4, (N, 3), dtype=jnp.float32)   # (N, 3)
    counts = jax.random.randint(k5, (N,), 1, 6, dtype=jnp.int32)

    down_coords, down_feats, down_points, down_counts = forward_maxpool_with_points(
        coords, feats, points, counts)
    jax.block_until_ready((down_feats, down_points, down_counts))

    # Reference check with pure-JAX segment ops.
    coords_np = np.asarray(coords)
    dn = coords_np.copy()
    dn[:, 1:] = (dn[:, 1:] // 2) * 2
    _, inv = np.unique(dn, axis=0, return_inverse=True)
    inv = np.asarray(inv).reshape(-1)
    M = int(inv.max()) + 1
    seg = jnp.asarray(inv.astype(np.int32))
    cf = counts.astype(jnp.float32)
    ref_feats = jax.ops.segment_max(feats, seg, num_segments=M)
    ref_num = jax.ops.segment_sum(points * cf[:, None], seg, num_segments=M)
    ref_den = jax.ops.segment_sum(cf, seg, num_segments=M)
    ref_points = ref_num / ref_den[:, None]

    np.testing.assert_allclose(np.asarray(down_feats), np.asarray(ref_feats),
                               rtol=1e-5, atol=1e-5)
    np.testing.assert_allclose(np.asarray(down_points), np.asarray(ref_points),
                               rtol=1e-5, atol=1e-5)
    np.testing.assert_allclose(np.asarray(down_counts),
                               np.asarray(ref_den).astype(np.int32))

    print("KERNEL_OK")
</pallas_src>

<mosaic_0001>
module attributes {stable_mosaic.version = 11 : i64} {
  func.func @_pool_slots_kernel(%arg0: i32, %arg1: memref<8x32x128xf32, #tpu.memory_space<vmem>>, %arg2: memref<8x32x128xf32, #tpu.memory_space<vmem>>, %arg3: memref<32x128xf32, #tpu.memory_space<vmem>>, %arg4: memref<32x128xf32, #tpu.memory_space<vmem>>) attributes {dimension_semantics = [#tpu.dimension_semantics<parallel>], iteration_bounds = array<i64: 2>, scalar_prefetch = 0 : i64, scratch_operands = 0 : i64, tpu.core_type = #tpu.core_type<tc>, window_params = [{transform_indices = @transform_0, window_bounds = array<i64: 8, 32, 128>}, {transform_indices = @transform_1, window_bounds = array<i64: 8, 32, 128>}, {transform_indices = @transform_2, window_bounds = array<i64: 32, 128>}, {transform_indices = @transform_3, window_bounds = array<i64: 32, 128>}]} {
    %c0 = arith.constant 0 : index
    %c0_0 = arith.constant 0 : index
    %c0_1 = arith.constant 0 : index
    %0 = vector.load %arg1[%c0, %c0_0, %c0_1] : memref<8x32x128xf32, #tpu.memory_space<vmem>>, vector<1x32x128xf32>
    %1 = vector.shape_cast %0 : vector<1x32x128xf32> to vector<32x128xf32>
    %c0_2 = arith.constant 0 : index
    %c0_3 = arith.constant 0 : index
    %c0_4 = arith.constant 0 : index
    %2 = vector.load %arg2[%c0_2, %c0_3, %c0_4] : memref<8x32x128xf32, #tpu.memory_space<vmem>>, vector<1x32x128xf32>
    %3 = vector.shape_cast %2 : vector<1x32x128xf32> to vector<32x128xf32>
    %c1 = arith.constant 1 : index
    %c0_5 = arith.constant 0 : index
    %c0_6 = arith.constant 0 : index
    %4 = vector.load %arg1[%c1, %c0_5, %c0_6] : memref<8x32x128xf32, #tpu.memory_space<vmem>>, vector<1x32x128xf32>
    %5 = vector.shape_cast %4 : vector<1x32x128xf32> to vector<32x128xf32>
    %6 = arith.maximumf %1, %5 : vector<32x128xf32>
    %c1_7 = arith.constant 1 : index
    %c0_8 = arith.constant 0 : index
    %c0_9 = arith.constant 0 : index
    %7 = vector.load %arg2[%c1_7, %c0_8, %c0_9] : memref<8x32x128xf32, #tpu.memory_space<vmem>>, vector<1x32x128xf32>
    %8 = vector.shape_cast %7 : vector<1x32x128xf32> to vector<32x128xf32>
    %9 = arith.addf %3, %8 : vector<32x128xf32>
    %c2 = arith.constant 2 : index
    %c0_10 = arith.constant 0 : index
    %c0_11 = arith.constant 0 : index
    %10 = vector.load %arg1[%c2, %c0_10, %c0_11] : memref<8x32x128xf32, #tpu.memory_space<vmem>>, vector<1x32x128xf32>
    %11 = vector.shape_cast %10 : vector<1x32x128xf32> to vector<32x128xf32>
    %12 = arith.maximumf %6, %11 : vector<32x128xf32>
    %c2_12 = arith.constant 2 : index
    %c0_13 = arith.constant 0 : index
    %c0_14 = arith.constant 0 : index
    %13 = vector.load %arg2[%c2_12, %c0_13, %c0_14] : memref<8x32x128xf32, #tpu.memory_space<vmem>>, vector<1x32x128xf32>
    %14 = vector.shape_cast %13 : vector<1x32x128xf32> to vector<32x128xf32>
    %15 = arith.addf %9, %14 : vector<32x128xf32>
    %c3 = arith.constant 3 : index
    %c0_15 = arith.constant 0 : index
    %c0_16 = arith.constant 0 : index
    %16 = vector.load %arg1[%c3, %c0_15, %c0_16] : memref<8x32x128xf32, #tpu.memory_space<vmem>>, vector<1x32x128xf32>
    %17 = vector.shape_cast %16 : vector<1x32x128xf32> to vector<32x128xf32>
    %18 = arith.maximumf %12, %17 : vector<32x128xf32>
    %c3_17 = arith.constant 3 : index
    %c0_18 = arith.constant 0 : index
    %c0_19 = arith.constant 0 : index
    %19 = vector.load %arg2[%c3_17, %c0_18, %c0_19] : memref<8x32x128xf32, #tpu.memory_space<vmem>>, vector<1x32x128xf32>
    %20 = vector.shape_cast %19 : vector<1x32x128xf32> to vector<32x128xf32>
    %21 = arith.addf %15, %20 : vector<32x128xf32>
    %c4 = arith.constant 4 : index
    %c0_20 = arith.constant 0 : index
    %c0_21 = arith.constant 0 : index
    %22 = vector.load %arg1[%c4, %c0_20, %c0_21] : memref<8x32x128xf32, #tpu.memory_space<vmem>>, vector<1x32x128xf32>
    %23 = vector.shape_cast %22 : vector<1x32x128xf32> to vector<32x128xf32>
    %24 = arith.maximumf %18, %23 : vector<32x128xf32>
    %c4_22 = arith.constant 4 : index
    %c0_23 = arith.constant 0 : index
    %c0_24 = arith.constant 0 : index
    %25 = vector.load %arg2[%c4_22, %c0_23, %c0_24] : memref<8x32x128xf32, #tpu.memory_space<vmem>>, vector<1x32x128xf32>
    %26 = vector.shape_cast %25 : vector<1x32x128xf32> to vector<32x128xf32>
    %27 = arith.addf %21, %26 : vector<32x128xf32>
    %c5 = arith.constant 5 : index
    %c0_25 = arith.constant 0 : index
    %c0_26 = arith.constant 0 : index
    %28 = vector.load %arg1[%c5, %c0_25, %c0_26] : memref<8x32x128xf32, #tpu.memory_space<vmem>>, vector<1x32x128xf32>
    %29 = vector.shape_cast %28 : vector<1x32x128xf32> to vector<32x128xf32>
    %30 = arith.maximumf %24, %29 : vector<32x128xf32>
    %c5_27 = arith.constant 5 : index
    %c0_28 = arith.constant 0 : index
    %c0_29 = arith.constant 0 : index
    %31 = vector.load %arg2[%c5_27, %c0_28, %c0_29] : memref<8x32x128xf32, #tpu.memory_space<vmem>>, vector<1x32x128xf32>
    %32 = vector.shape_cast %31 : vector<1x32x128xf32> to vector<32x128xf32>
    %33 = arith.addf %27, %32 : vector<32x128xf32>
    %c6 = arith.constant 6 : index
    %c0_30 = arith.constant 0 : index
    %c0_31 = arith.constant 0 : index
    %34 = vector.load %arg1[%c6, %c0_30, %c0_31] : memref<8x32x128xf32, #tpu.memory_space<vmem>>, vector<1x32x128xf32>
    %35 = vector.shape_cast %34 : vector<1x32x128xf32> to vector<32x128xf32>
    %36 = arith.maximumf %30, %35 : vector<32x128xf32>
    %c6_32 = arith.constant 6 : index
    %c0_33 = arith.constant 0 : index
    %c0_34 = arith.constant 0 : index
    %37 = vector.load %arg2[%c6_32, %c0_33, %c0_34] : memref<8x32x128xf32, #tpu.memory_space<vmem>>, vector<1x32x128xf32>
    %38 = vector.shape_cast %37 : vector<1x32x128xf32> to vector<32x128xf32>
    %39 = arith.addf %33, %38 : vector<32x128xf32>
    %c7 = arith.constant 7 : index
    %c0_35 = arith.constant 0 : index
    %c0_36 = arith.constant 0 : index
    %40 = vector.load %arg1[%c7, %c0_35, %c0_36] : memref<8x32x128xf32, #tpu.memory_space<vmem>>, vector<1x32x128xf32>
    %41 = vector.shape_cast %40 : vector<1x32x128xf32> to vector<32x128xf32>
    %42 = arith.maximumf %36, %41 : vector<32x128xf32>
    %c7_37 = arith.constant 7 : index
    %c0_38 = arith.constant 0 : index
    %c0_39 = arith.constant 0 : index
    %43 = vector.load %arg2[%c7_37, %c0_38, %c0_39] : memref<8x32x128xf32, #tpu.memory_space<vmem>>, vector<1x32x128xf32>
    %44 = vector.shape_cast %43 : vector<1x32x128xf32> to vector<32x128xf32>
    %45 = arith.addf %39, %44 : vector<32x128xf32>
    %46 = vector.extract_strided_slice %45 {offsets = [0, 3], sizes = [32, 1], strides = [1, 1]} : vector<32x128xf32> to vector<32x1xf32>
    %cst = arith.constant 0.000000e+00 : f32
    %47 = vector.broadcast %cst : f32 to vector<32x1xf32>
    %48 = arith.cmpf ogt, %46, %47 : vector<32x1xf32>
    %cst_40 = arith.constant 1.000000e+00 : f32
    %49 = vector.broadcast %cst_40 : f32 to vector<32x1xf32>
    %50 = arith.select %48, %46, %49 : vector<32x1xi1>, vector<32x1xf32>
    %51 = tpu.iota {dimensions = array<i32: 1>} : vector<32x128xi32>
    %c3_i32 = arith.constant 3 : i32
    %52 = vector.broadcast %c3_i32 : i32 to vector<32x128xi32>
    %53 = arith.cmpi eq, %51, %52 : vector<32x128xi32>
    %cst_41 = arith.constant 1.000000e+00 : f32
    %54 = vector.broadcast %cst_41 : f32 to vector<32x128xf32>
    %55 = vector.shape_cast %50 : vector<32x1xf32> to vector<32x1xf32>
    %56 = vector.broadcast %55 : vector<32x1xf32> to vector<32x128xf32>
    %57 = arith.select %53, %54, %56 : vector<32x128xi1>, vector<32x128xf32>
    %58 = arith.divf %45, %57 : vector<32x128xf32>
    %cst_42 = arith.constant 0.000000e+00 : f32
    %59 = vector.shape_cast %48 : vector<32x1xi1> to vector<32x1xi1>
    %60 = vector.broadcast %59 : vector<32x1xi1> to vector<32x128xi1>
    %61 = vector.broadcast %cst_42 : f32 to vector<32x128xf32>
    %62 = arith.select %60, %58, %61 : vector<32x128xi1>, vector<32x128xf32>
    %c0_43 = arith.constant 0 : index
    %c0_44 = arith.constant 0 : index
    %63 = vector.load %arg4[%c0_43, %c0_44] : memref<32x128xf32, #tpu.memory_space<vmem>>, vector<32x128xf32>
    tpu.vector_store %arg4[%c0_43, %c0_44], %62 {strides = array<i32>} : memref<32x128xf32, #tpu.memory_space<vmem>>, vector<32x128xf32>,
    %cst_45 = arith.constant 0.000000e+00 : f32
    %64 = vector.shape_cast %48 : vector<32x1xi1> to vector<32x1xi1>
    %65 = vector.broadcast %64 : vector<32x1xi1> to vector<32x128xi1>
    %66 = vector.broadcast %cst_45 : f32 to vector<32x128xf32>
    %67 = arith.select %65, %42, %66 : vector<32x128xi1>, vector<32x128xf32>
    %c0_46 = arith.constant 0 : index
    %c0_47 = arith.constant 0 : index
    %68 = vector.load %arg3[%c0_46, %c0_47] : memref<32x128xf32, #tpu.memory_space<vmem>>, vector<32x128xf32>
    tpu.vector_store %arg3[%c0_46, %c0_47], %67 {strides = array<i32>} : memref<32x128xf32, #tpu.memory_space<vmem>>, vector<32x128xf32>,
    return
  }
  func.func @transform_0(%arg0: i32) -> (i32, i32, i32) {
    %c0_i32 = arith.constant 0 : i32
    %c0_i32_0 = arith.constant 0 : i32
    %c0_i32_1 = arith.constant 0 : i32
    return %c0_i32, %arg0, %c0_i32_0 : i32, i32, i32
  }
  func.func @transform_1(%arg0: i32) -> (i32, i32, i32) {
    %c0_i32 = arith.constant 0 : i32
    %c0_i32_0 = arith.constant 0 : i32
    %c0_i32_1 = arith.constant 0 : i32
    return %c0_i32, %arg0, %c0_i32_0 : i32, i32, i32
  }
  func.func @transform_2(%arg0: i32) -> (i32, i32) {
    %c0_i32 = arith.constant 0 : i32
    %c0_i32_0 = arith.constant 0 : i32
    return %arg0, %c0_i32 : i32, i32
  }
  func.func @transform_3(%arg0: i32) -> (i32, i32) {
    %c0_i32 = arith.constant 0 : i32
    %c0_i32_0 = arith.constant 0 : i32
    return %arg0, %c0_i32 : i32, i32
  }
}

</mosaic_0001>

<llo_original>
// kernel: tpu_custom_call.1
$region0: #{tpu_custom_call.1}
  #allocation0 [shape = 'u32[]', space=smem, size = 0x4, offset = 0x4, fixed_abs, tag = 'smem constant byte address 0x4 - core index']
  #allocation1 [shape = 'u32[72,128]{1,0:T(1,128)}', space=vmem, size = 0x9000, scoped, tag = 'internal scratch']
  #allocation10 [shape = 's32[]', space=sflag, size = 0x4, offset = 0, fixed_abs, tag = 'sflag constant byte address 0x0 - dummy sync flag']
  #allocation12 [shape = 's32[]', space=sflag, size = 0x4, offset = 0, fixed_abs, tag = 'sflag constant byte address 0x0 - dummy sync flag']
  %s0 = inlined_call_operand.hbm [shape: f32[8,64,128], index: 0, kind: input, shape index: {}]
  %s1 = inlined_call_operand.hbm [shape: f32[8,64,128], index: 1, kind: input, shape index: {}]
  %s2 = inlined_call_operand.hbm [shape: f32[64,128], index: 2, kind: output, shape index: {0}]
  %s3 = inlined_call_operand.hbm [shape: f32[64,128], index: 3, kind: output, shape index: {1}]
  %4 = xla_tuple %s2, %s3
  %s5 = sld [smem:[#allocation0]]
  $region57: #{tpu_custom_call.1} parent=0
    _
  %s7 = ssub.s32 1, %s5
  %s8 = scalar_select 0, %s7, %s5
  $region1: #{tpu_custom_call.1} parent=0
    #allocation2 [shape = 'u8[262144]{0}', space=vmem, size = 0x40000, scoped, tag = 'input window, operand 0']
    #allocation3 [shape = 's32[2]{0}', space=sflag, size = 0x8, scoped, tag = 'scoped memory for tpu_custom_call.1']
    #allocation4 [shape = 's32[2]{0}', space=sflag, size = 0x8, scoped, tag = 'scoped memory for tpu_custom_call.1']
    #allocation5 [shape = 'u8[262144]{0}', space=vmem, size = 0x40000, scoped, tag = 'input window, operand 1']
    #allocation6 [shape = 's32[2]{0}', space=sflag, size = 0x8, scoped, tag = 'scoped memory for tpu_custom_call.1']
    #allocation7 [shape = 'u8[32768]{0}', space=vmem, size = 0x8000, scoped, tag = 'output window, operand 0']
    #allocation8 [shape = 'u8[32768]{0}', space=vmem, size = 0x8000, scoped, tag = 'output window, operand 1']
    #allocation9 [shape = 's32[2]{0}', space=sflag, size = 0x8, scoped, tag = 'scoped memory for tpu_custom_call.1']
    %9 = vsyncpa [#allocation3], 0
    %s10 = scalar_lea.sflag [#allocation3], 1
    %11 = vsyncpa %s10, 0
    %12 = vsyncpa [#allocation6], 0
    %s13 = scalar_lea.sflag [#allocation6], 1
    %14 = vsyncpa %s13, 0
    %15 = vsyncpa [#allocation4], 0
    %s16 = scalar_lea.sflag [#allocation4], 1
    %17 = vsyncpa %s16, 0
    %18 = vsyncpa [#allocation9], 0
    %s19 = scalar_lea.sflag [#allocation9], 1
    %20 = vsyncpa %s19, 0
    loop: start=0, step=1, limit=4
    $region2: #{tpu_custom_call.1} parent=1 // loop_pre_header
      _
    $region3: #{tpu_custom_call.1} parent=1 // loop_header
      %s22 = sphi 0, %s26
      %p23 = scmp.ge.s32.totalorder %s22, 4
      %s32 = sphi 0, %s34
      %s35 = sphi 0, %s32
      %s36 = sphi 0, %s35
      %s52 = sphi 0, %s36
      %s58 = sphi 0, %s60
      %s61 = sphi 0, %s58
      %s62 = sphi 0, %s61
      %s78 = sphi 0, %s62
      %s84 = sphi 0, %s86
      %s87 = sphi 0, %s84
      %s88 = sphi 0, %s87
      %s104 = sphi 0, %s88
      %s110 = sphi 0, %s112
      %s113 = sphi 0, %s110
      %s114 = sphi 0, %s113
      %s130 = sphi 0, %s114
    $region4: #{tpu_custom_call.1} parent=1 // loop_header_branch
      %25 = sbr.rel (%p23) target = $region8
    $region5: #{tpu_custom_call.1} parent=1 // loop_body
      %s27 = ssub.s32 %s22, 1
      %s28 = ssub.s32 %s22, 2
      %s29 = sadd.s32 %s22, 1
      %s30 = ssub.s32 %s22, %s29
      %p31 = scmp.eq.s32.totalorder %s30, 0
      %s33 = sadd.s32 %s32, 1
      %s34 = scalar_select %p31, %s32, %s33
      %p37 = pneg %p31
      %p38 = scmp.eq.s32.totalorder %s22, 1
      %p39 = por %p37, %p38
      %p40 = scmp.ne.s32.totalorder %s32, %s35
      %p41 = scmp.eq.s32.totalorder %s22, 0
      %p42 = por %p40, %p41
      %p43 = scmp.ne.s32.totalorder %s32, %s35
      %p44 = scmp.eq.s32.totalorder %s27, 1
      %p45 = por %p43, %p44
      %p46 = scmp.ne.s32.totalorder %s35, %s36
      %p47 = scmp.eq.s32.totalorder %s27, 0
      %p48 = por %p46, %p47
      %p49 = scmp.ne.s32.totalorder %s35, %s36
      %p50 = scmp.eq.s32.totalorder %s28, 1
      %p51 = por %p49, %p50
      %p53 = scmp.ne.s32.totalorder %s36, %s52
      %p54 = scmp.eq.s32.totalorder %s28, 0
      %p55 = por %p53, %p54
      %s56 = ssub.s32 %s22, %s29
      %p57 = scmp.eq.s32.totalorder %s56, 0
      %s59 = sadd.s32 %s58, 1
      %s60 = scalar_select %p57, %s58, %s59
      %p63 = pneg %p57
      %p64 = scmp.eq.s32.totalorder %s22, 1
      %p65 = por %p63, %p64
      %p66 = scmp.ne.s32.totalorder %s58, %s61
      %p67 = scmp.eq.s32.totalorder %s22, 0
      %p68 = por %p66, %p67
      %p69 = scmp.ne.s32.totalorder %s58, %s61
      %p70 = scmp.eq.s32.totalorder %s27, 1
      %p71 = por %p69, %p70
      %p72 = scmp.ne.s32.totalorder %s61, %s62
      %p73 = scmp.eq.s32.totalorder %s27, 0
      %p74 = por %p72, %p73
      %p75 = scmp.ne.s32.totalorder %s61, %s62
      %p76 = scmp.eq.s32.totalorder %s28, 1
      %p77 = por %p75, %p76
      %p79 = scmp.ne.s32.totalorder %s62, %s78
      %p80 = scmp.eq.s32.totalorder %s28, 0
      %p81 = por %p79, %p80
      %s82 = ssub.s32 %s22, %s29
      %p83 = scmp.eq.s32.totalorder %s82, 0
      %s85 = sadd.s32 %s84, 1
      %s86 = scalar_select %p83, %s84, %s85
      %p89 = pneg %p83
      %p90 = scmp.eq.s32.totalorder %s22, 1
      %p91 = por %p89, %p90
      %p92 = scmp.ne.s32.totalorder %s84, %s87
      %p93 = scmp.eq.s32.totalorder %s22, 0
      %p94 = por %p92, %p93
      %p95 = scmp.ne.s32.totalorder %s84, %s87
      %p96 = scmp.eq.s32.totalorder %s27, 1
      %p97 = por %p95, %p96
      %p98 = scmp.ne.s32.totalorder %s87, %s88
      %p99 = scmp.eq.s32.totalorder %s27, 0
      %p100 = por %p98, %p99
      %p101 = scmp.ne.s32.totalorder %s87, %s88
      %p102 = scmp.eq.s32.totalorder %s28, 1
      %p103 = por %p101, %p102
      %p105 = scmp.ne.s32.totalorder %s88, %s104
      %p106 = scmp.eq.s32.totalorder %s28, 0
      %p107 = por %p105, %p106
      %s108 = ssub.s32 %s22, %s29
      %p109 = scmp.eq.s32.totalorder %s108, 0
      %s111 = sadd.s32 %s110, 1
      %s112 = scalar_select %p109, %s110, %s111
      %p115 = pneg %p109
      %p116 = scmp.eq.s32.totalorder %s22, 1
      %p117 = por %p115, %p116
      %p118 = scmp.ne.s32.totalorder %s110, %s113
      %p119 = scmp.eq.s32.totalorder %s22, 0
      %p120 = por %p118, %p119
      %p121 = scmp.ne.s32.totalorder %s110, %s113
      %p122 = scmp.eq.s32.totalorder %s27, 1
      %p123 = por %p121, %p122
      %p124 = scmp.ne.s32.totalorder %s113, %s114
      %p125 = scmp.eq.s32.totalorder %s27, 0
      %p126 = por %p124, %p125
      %p127 = scmp.ne.s32.totalorder %s113, %s114
      %p128 = scmp.eq.s32.totalorder %s28, 1
      %p129 = por %p127, %p128
      %p131 = scmp.ne.s32.totalorder %s114, %s130
      %p132 = scmp.eq.s32.totalorder %s28, 0
      %p133 = por %p131, %p132
      %p134 = scmp.le.s32.totalorder 1, %s22
      %p135 = scmp.lt.s32.totalorder %s22, 3
      %p136 = pnand %p134, %p135
      %p137 = pneg %p136
      // Predicated region
      $region9: #{tpu_custom_call.1} parent=5 // pred_check
        _
      $region10: #{tpu_custom_call.1} parent=5 // pred_check_branch
        %139 = sbr.rel (%p136) target = $region12
      $region11: #{tpu_custom_call.1} parent=5 // pred_region
        %s140 = ssub.s32 %s22, 1
      $region12: #{tpu_custom_call.1} parent=5 // pred_fallthru
        _
      %p141 = scmp.lt.s32.totalorder %s22, 2
      // Predicated region
      $region13: #{tpu_custom_call.1} parent=5 // pred_check
        %p142 = pneg %p141
      $region14: #{tpu_custom_call.1} parent=5 // pred_check_branch
        %144 = sbr.rel (%p142) target = $region16
      $region15: #{tpu_custom_call.1} parent=5 // pred_region
        // Predicated region
        $region17: #{tpu_custom_call.1} parent=15 // pred_check
          %p145 = pneg %p42
        $region18: #{tpu_custom_call.1} parent=15 // pred_check_branch
          %147 = sbr.rel (%p145) target = $region20
        $region19: #{tpu_custom_call.1} parent=15 // pred_region
          #allocation11 [shape = 'u32[6]{0}', space=smem, size = 0x18, scoped, tag = 'DMA stride descriptor']
          %s148 = sand.u32 %s32, 1
          %s149 = scalar_lea.sflag [#allocation3], %s148
          %s150 = sand.u32 %s32, 1
          %s151 = smul.addr %s150, 256
          %s152 = scalar_lea.vmem [#allocation2], %s151
          %s153 = smul.u32 4, %s22
          %155 = vsyncadd %s149, 0
          %s156 = smul.addr %s153, 8
          %s157 = scalar_lea.hbm %s0, %s156
          %s159 = sshll.u32 1, 14
          %s160 = sxor.u32 4294967295, %s159
          %s162 = sld [smem:[#allocation0]]
          %s163 = sadd.s32 2, %s162
          %s165 = sshll.u32 7, 26
          %s166 = sxor.u32 4294967295, %s165
          %s167 = sand.u32 0, %s166
          %s168 = sshll.u32 %s163, 26
          %s169 = sor.u32 %s167, %s168
          %s170 = sshll.u32 %s157, 4
          %s171 = int_to_ptr.hbm [resolvable:$true] %s170
          %s172 = sshll.u32 %s152, 4
          %s173 = int_to_ptr.vmem [resolvable:$true] %s172
          %179 = sst [smem:[#allocation11]] 1024
          %s180 = scalar_lea.smem [#allocation11], 1
          %181 = sst [smem:[%s180]] 512
          %s182 = scalar_lea.smem [#allocation11], 2
          %183 = sst [smem:[%s182]] 4
          %s184 = scalar_lea.smem [#allocation11], 3
          %185 = sst [smem:[%s184]] 128
          %s186 = scalar_lea.smem [#allocation11], 4
          %187 = sst [smem:[%s186]] 128
          %s188 = scalar_lea.smem [#allocation11], 5
          %189 = sst [smem:[%s188]] 8
          %191 = dma.general %s171, 4096, %s173, %s149, [#allocation10], [#allocation11], %s169, 0
        $region20: #{tpu_custom_call.1} parent=15 // pred_fallthru
          _
        // Predicated region
        $region21: #{tpu_custom_call.1} parent=15 // pred_check
          %p192 = pneg %p68
        $region22: #{tpu_custom_call.1} parent=15 // pred_check_branch
          %194 = sbr.rel (%p192) target = $region24
        $region23: #{tpu_custom_call.1} parent=15 // pred_region
          #allocation13 [shape = 'u32[6]{0}', space=smem, size = 0x18, scoped, tag = 'DMA stride descriptor']
          %s195 = sand.u32 %s58, 1
          %s196 = scalar_lea.sflag [#allocation6], %s195
          %s197 = sand.u32 %s58, 1
          %s198 = smul.addr %s197, 256
          %s199 = scalar_lea.vmem [#allocation5], %s198
          %s200 = smul.u32 4, %s22
          %202 = vsyncadd %s196, 0
          %s203 = smul.addr %s200, 8
          %s204 = scalar_lea.hbm %s1, %s203
          %s206 = sshll.u32 1, 14
          %s207 = sxor.u32 4294967295, %s206
          %s209 = sld [smem:[#allocation0]]
          %s210 = sadd.s32 2, %s209
          %s212 = sshll.u32 7, 26
          %s213 = sxor.u32 4294967295, %s212
          %s214 = sand.u32 0, %s213
          %s215 = sshll.u32 %s210, 26
          %s216 = sor.u32 %s214, %s215
          %s217 = sshll.u32 %s204, 4
          %s218 = int_to_ptr.hbm [resolvable:$true] %s217
          %s219 = sshll.u32 %s199, 4
          %s220 = int_to_ptr.vmem [resolvable:$true] %s219
          %226 = sst [smem:[#allocation13]] 1024
          %s227 = scalar_lea.smem [#allocation13], 1
          %228 = sst [smem:[%s227]] 512
          %s229 = scalar_lea.smem [#allocation13], 2
          %230 = sst [smem:[%s229]] 4
          %s231 = scalar_lea.smem [#allocation13], 3
          %232 = sst [smem:[%s231]] 128
          %s233 = scalar_lea.smem [#allocation13], 4
          %234 = sst [smem:[%s233]] 128
          %s235 = scalar_lea.smem [#allocation13], 5
          %236 = sst [smem:[%s235]] 8
          %238 = dma.general %s218, 4096, %s220, %s196, [#allocation12], [#allocation13], %s216, 0
        $region24: #{tpu_custom_call.1} parent=15 // pred_fallthru
          _
      $region16: #{tpu_custom_call.1} parent=5 // pred_fallthru
        _
      %p239 = scmp.le.s32.totalorder 1, %s22
      %p240 = scmp.lt.s32.totalorder %s22, 3
      %p241 = pnand %p239, %p240
      %p242 = pneg %p241
      // Predicated region
      $region25: #{tpu_custom_call.1} parent=5 // pred_check
        _
      $region26: #{tpu_custom_call.1} parent=5 // pred_check_branch
        %244 = sbr.rel (%p241) target = $region28
      $region27: #{tpu_custom_call.1} parent=5 // pred_region
        %s245 = ssub.s32 %s22, 1
        %s246 = sand.u32 %s35, 1
        %s247 = scalar_lea.sflag [#allocation3], %s246
        %s248 = sand.u32 %s35, 1
        %s249 = smul.addr %s248, 256
        %s250 = scalar_lea.vmem [#allocation2], %s249
        // Predicated region
        $region29: #{tpu_custom_call.1} parent=27 // pred_check
          %p251 = pneg %p48
        $region30: #{tpu_custom_call.1} parent=27 // pred_check_branch
          %253 = sbr.rel (%p251) target = $region32
        $region31: #{tpu_custom_call.1} parent=27 // pred_region
          %255 = dma.done %s247, 4096
        $region32: #{tpu_custom_call.1} parent=27 // pred_fallthru
          _
        %s256 = sand.u32 %s61, 1
        %s257 = scalar_lea.sflag [#allocation6], %s256
        %s258 = sand.u32 %s61, 1
        %s259 = smul.addr %s258, 256
        %s260 = scalar_lea.vmem [#allocation5], %s259
        // Predicated region
        $region33: #{tpu_custom_call.1} parent=27 // pred_check
          %p261 = pneg %p74
        $region34: #{tpu_custom_call.1} parent=27 // pred_check_branch
          %263 = sbr.rel (%p261) target = $region36
        $region35: #{tpu_custom_call.1} parent=27 // pred_region
          %265 = dma.done %s257, 4096
        $region36: #{tpu_custom_call.1} parent=27 // pred_fallthru
          _
        %s266 = sand.u32 %s35, 1
        %s267 = scalar_lea.sflag [#allocation3], %s266
        %s268 = sand.u32 %s35, 1
        %s269 = smul.addr %s268, 256
        %s270 = scalar_lea.vmem [#allocation2], %s269
        %p271 = pneg %p48
        %p272 = pneg %p45
        %s273 = sand.u32 %s61, 1
        %s274 = scalar_lea.sflag [#allocation6], %s273
        %s275 = sand.u32 %s61, 1
        %s276 = smul.addr %s275, 256
        %s277 = scalar_lea.vmem [#allocation5], %s276
        %p278 = pneg %p74
        %p279 = pneg %p71
        %p280 = pneg %p100
        %p281 = pneg %p97
        %s282 = sand.u32 %s87, 1
        %s283 = scalar_lea.sflag [#allocation4], %s282
        %s284 = sand.u32 %s87, 1
        %s285 = smul.addr %s284, 32
        %s286 = scalar_lea.vmem [#allocation7], %s285
        %p287 = pneg %p126
        %p288 = pneg %p123
        %s289 = sand.u32 %s113, 1
        %s290 = scalar_lea.sflag [#allocation9], %s289
        %s291 = sand.u32 %s113, 1
        %s292 = smul.addr %s291, 32
        %s293 = scalar_lea.vmem [#allocation8], %s292
        %s294 = smul.u32 4, %s27
        %s295 = smul.u32 4, %s27
        %s296 = smul.u32 4, %s27
        %s297 = smul.u32 4, %s27
        %v298 = vld [vmem:[%s250] sm:$0xff]
        %v299 = vld [vmem:[%s250 + $0x8] sm:$0xff]
        %v300 = vld [vmem:[%s250 + $0x10] sm:$0xff]
        %v301 = vld [vmem:[%s250 + $0x18] sm:$0xff]
        %v302 = vld [vmem:[%s260] sm:$0xff]
        %v303 = vld [vmem:[%s260 + $0x8] sm:$0xff]
        %v304 = vld [vmem:[%s260 + $0x10] sm:$0xff]
        %v305 = vld [vmem:[%s260 + $0x18] sm:$0xff]
        %s306 = scalar_lea.vmem %s250, 32 [#allocation2]
        %v307 = vld [vmem:[%s306] sm:$0xff]
        %v308 = vld [vmem:[%s306 + $0x8] sm:$0xff]
        %v309 = vld [vmem:[%s306 + $0x10] sm:$0xff]
        %v310 = vld [vmem:[%s306 + $0x18] sm:$0xff]
        %v311 = vmax.f32 %v298, %v307
        %v312 = vmax.f32 %v299, %v308
        %v313 = vmax.f32 %v300, %v309
        %v314 = vmax.f32 %v301, %v310
        %s315 = scalar_lea.vmem %s260, 32 [#allocation5]
        %v316 = vld [vmem:[%s315] sm:$0xff]
        %v317 = vld [vmem:[%s315 + $0x8] sm:$0xff]
        %v318 = vld [vmem:[%s315 + $0x10] sm:$0xff]
        %v319 = vld [vmem:[%s315 + $0x18] sm:$0xff]
        %v320 = vadd.f32 %v302, %v316
        %v321 = vadd.f32 %v303, %v317
        %v322 = vadd.f32 %v304, %v318
        %v323 = vadd.f32 %v305, %v319
        %s324 = scalar_lea.vmem %s250, 64 [#allocation2]
        %v325 = vld [vmem:[%s324] sm:$0xff]
        %v326 = vld [vmem:[%s324 + $0x8] sm:$0xff]
        %v327 = vld [vmem:[%s324 + $0x10] sm:$0xff]
        %v328 = vld [vmem:[%s324 + $0x18] sm:$0xff]
        %v329 = vmax.f32 %v311, %v325
        %v330 = vmax.f32 %v312, %v326
        %v331 = vmax.f32 %v313, %v327
        %v332 = vmax.f32 %v314, %v328
        %s333 = scalar_lea.vmem %s260, 64 [#allocation5]
        %v334 = vld [vmem:[%s333] sm:$0xff]
        %v335 = vld [vmem:[%s333 + $0x8] sm:$0xff]
        %v336 = vld [vmem:[%s333 + $0x10] sm:$0xff]
        %v337 = vld [vmem:[%s333 + $0x18] sm:$0xff]
        %v338 = vadd.f32 %v320, %v334
        %v339 = vadd.f32 %v321, %v335
        %v340 = vadd.f32 %v322, %v336
        %v341 = vadd.f32 %v323, %v337
        %s342 = scalar_lea.vmem %s250, 96 [#allocation2]
        %v343 = vld [vmem:[%s342] sm:$0xff]
        %v344 = vld [vmem:[%s342 + $0x8] sm:$0xff]
        %v345 = vld [vmem:[%s342 + $0x10] sm:$0xff]
        %v346 = vld [vmem:[%s342 + $0x18] sm:$0xff]
        %v347 = vmax.f32 %v329, %v343
        %v348 = vmax.f32 %v330, %v344
        %v349 = vmax.f32 %v331, %v345
        %v350 = vmax.f32 %v332, %v346
        %s351 = scalar_lea.vmem %s260, 96 [#allocation5]
        %v352 = vld [vmem:[%s351] sm:$0xff]
        %v353 = vld [vmem:[%s351 + $0x8] sm:$0xff]
        %v354 = vld [vmem:[%s351 + $0x10] sm:$0xff]
        %v355 = vld [vmem:[%s351 + $0x18] sm:$0xff]
        %v356 = vadd.f32 %v338, %v352
        %v357 = vadd.f32 %v339, %v353
        %v358 = vadd.f32 %v340, %v354
        %v359 = vadd.f32 %v341, %v355
        %s360 = scalar_lea.vmem %s250, 128 [#allocation2]
        %v361 = vld [vmem:[%s360] sm:$0xff]
        %v362 = vld [vmem:[%s360 + $0x8] sm:$0xff]
        %v363 = vld [vmem:[%s360 + $0x10] sm:$0xff]
        %v364 = vld [vmem:[%s360 + $0x18] sm:$0xff]
        %v365 = vmax.f32 %v347, %v361
        %v366 = vmax.f32 %v348, %v362
        %v367 = vmax.f32 %v349, %v363
        %v368 = vmax.f32 %v350, %v364
        %s369 = scalar_lea.vmem %s260, 128 [#allocation5]
        %v370 = vld [vmem:[%s369] sm:$0xff]
        %v371 = vld [vmem:[%s369 + $0x8] sm:$0xff]
        %v372 = vld [vmem:[%s369 + $0x10] sm:$0xff]
        %v373 = vld [vmem:[%s369 + $0x18] sm:$0xff]
        %v374 = vadd.f32 %v356, %v370
        %v375 = vadd.f32 %v357, %v371
        %v376 = vadd.f32 %v358, %v372
        %v377 = vadd.f32 %v359, %v373
        %s378 = scalar_lea.vmem %s250, 160 [#allocation2]
        %v379 = vld [vmem:[%s378] sm:$0xff]
        %v380 = vld [vmem:[%s378 + $0x8] sm:$0xff]
        %v381 = vld [vmem:[%s378 + $0x10] sm:$0xff]
        %v382 = vld [vmem:[%s378 + $0x18] sm:$0xff]
        %v383 = vmax.f32 %v365, %v379
        %v384 = vmax.f32 %v366, %v380
        %v385 = vmax.f32 %v367, %v381
        %v386 = vmax.f32 %v368, %v382
        %s387 = scalar_lea.vmem %s260, 160 [#allocation5]
        %v388 = vld [vmem:[%s387] sm:$0xff]
        %v389 = vld [vmem:[%s387 + $0x8] sm:$0xff]
        %v390 = vld [vmem:[%s387 + $0x10] sm:$0xff]
        %v391 = vld [vmem:[%s387 + $0x18] sm:$0xff]
        %v392 = vadd.f32 %v374, %v388
        %v393 = vadd.f32 %v375, %v389
        %v394 = vadd.f32 %v376, %v390
        %v395 = vadd.f32 %v377, %v391
        %s396 = scalar_lea.vmem %s250, 192 [#allocation2]
        %v397 = vld [vmem:[%s396] sm:$0xff]
        %v398 = vld [vmem:[%s396 + $0x8] sm:$0xff]
        %v399 = vld [vmem:[%s396 + $0x10] sm:$0xff]
        %v400 = vld [vmem:[%s396 + $0x18] sm:$0xff]
        %v401 = vmax.f32 %v383, %v397
        %v402 = vmax.f32 %v384, %v398
        %v403 = vmax.f32 %v385, %v399
        %v404 = vmax.f32 %v386, %v400
        %s405 = scalar_lea.vmem %s260, 192 [#allocation5]
        %v406 = vld [vmem:[%s405] sm:$0xff]
        %v407 = vld [vmem:[%s405 + $0x8] sm:$0xff]
        %v408 = vld [vmem:[%s405 + $0x10] sm:$0xff]
        %v409 = vld [vmem:[%s405 + $0x18] sm:$0xff]
        %v410 = vadd.f32 %v392, %v406
        %v411 = vadd.f32 %v393, %v407
        %v412 = vadd.f32 %v394, %v408
        %v413 = vadd.f32 %v395, %v409
        %s414 = scalar_lea.vmem %s250, 224 [#allocation2]
        %v415 = vld [vmem:[%s414] sm:$0xff]
        %v416 = vld [vmem:[%s414 + $0x8] sm:$0xff]
        %v417 = vld [vmem:[%s414 + $0x10] sm:$0xff]
        %v418 = vld [vmem:[%s414 + $0x18] sm:$0xff]
        %v419 = vmax.f32 %v401, %v415
        %v420 = vmax.f32 %v402, %v416
        %v421 = vmax.f32 %v403, %v417
        %v422 = vmax.f32 %v404, %v418
        %s423 = scalar_lea.vmem %s260, 224 [#allocation5]
        %v424 = vld [vmem:[%s423] sm:$0xff]
        %v425 = vld [vmem:[%s423 + $0x8] sm:$0xff]
        %v426 = vld [vmem:[%s423 + $0x10] sm:$0xff]
        %v427 = vld [vmem:[%s423 + $0x18] sm:$0xff]
        %v428 = vadd.f32 %v410, %v424
        %v429 = vadd.f32 %v411, %v425
        %v430 = vadd.f32 %v412, %v426
        %v431 = vadd.f32 %v413, %v427
        %vm432 = vcmp.gt.f32.partialorder %v428, 0.0
        %vm433 = vcmp.gt.f32.partialorder %v429, 0.0
        %vm434 = vcmp.gt.f32.partialorder %v430, 0.0
        %vm435 = vcmp.gt.f32.partialorder %v431, 0.0
        %v436 = vsel %vm432, %v428, 1.0
        %v437 = vsel %vm433, %v429, 1.0
        %v438 = vsel %vm434, %v430, 1.0
        %v439 = vsel %vm435, %v431, 1.0
        %v440 = vlaneseq
        %v441 = vand.u32 %v440, 127
        %vm442 = vcmp.eq.s32.totalorder %v441, 3
        %444 = vset.pattern.permute.xlu0 3
        %445 = vperm.xlu0 %444, %v436
        %v446 = vpop.permute.xlu0 %445
        %449 = vset.pattern.permute.xlu0 3
        %450 = vperm.xlu0 %449, %v437
        %v451 = vpop.permute.xlu0 %450
        %454 = vset.pattern.permute.xlu0 3
        %455 = vperm.xlu0 %454, %v438
        %v456 = vpop.permute.xlu0 %455
        %459 = vset.pattern.permute.xlu0 3
        %460 = vperm.xlu0 %459, %v439
        %v461 = vpop.permute.xlu0 %460
        %v463 = vsel %vm442, 1.0, %v446
        %v464 = vsel %vm442, 1.0, %v451
        %v465 = vsel %vm442, 1.0, %v456
        %v466 = vsel %vm442, 1.0, %v461
        %v467 = vrcp.pop %v463
        %v468 = vmul.f32 %v463, %v467
        %v469 = vsub.f32 1.0, %v468
        %v470 = vmul.f32 %v467, %v469
        %v471 = vadd.f32 %v467, %v470
        %vm472 = vweird.f32 %v463
        %vm473 = vweird.f32 %v467
        %vm474 = vmor %vm472, %vm473
        %v475 = vsel %vm474, %v467, %v471
        %v476 = vand.u32 2147483647, %v463
        %vm477 = vcmp.eq.f32.partialorder %v476, 8.507059e+37
        %v478 = vand.u32 %v463, 2147483648
        %v479 = vor.u32 1.1754944e-38, %v478
        %v480 = vsel %vm477, %v479, %v475
        %v481 = vmul.f32 %v428, %v480
        %v482 = vrcp.pop %v464
        %v483 = vmul.f32 %v464, %v482
        %v484 = vsub.f32 1.0, %v483
        %v485 = vmul.f32 %v482, %v484
        %v486 = vadd.f32 %v482, %v485
        %vm487 = vweird.f32 %v464
        %vm488 = vweird.f32 %v482
        %vm489 = vmor %vm487, %vm488
        %v490 = vsel %vm489, %v482, %v486
        %v491 = vand.u32 2147483647, %v464
        %vm492 = vcmp.eq.f32.partialorder %v491, 8.507059e+37
        %v493 = vand.u32 %v464, 2147483648
        %v494 = vor.u32 1.1754944e-38, %v493
        %v495 = vsel %vm492, %v494, %v490
        %v496 = vmul.f32 %v429, %v495
        %v497 = vrcp.pop %v465
        %v498 = vmul.f32 %v465, %v497
        %v499 = vsub.f32 1.0, %v498
        %v500 = vmul.f32 %v497, %v499
        %v501 = vadd.f32 %v497, %v500
        %vm502 = vweird.f32 %v465
        %vm503 = vweird.f32 %v497
        %vm504 = vmor %vm502, %vm503
        %v505 = vsel %vm504, %v497, %v501
        %v506 = vand.u32 2147483647, %v465
        %vm507 = vcmp.eq.f32.partialorder %v506, 8.507059e+37
        %v508 = vand.u32 %v465, 2147483648
        %v509 = vor.u32 1.1754944e-38, %v508
        %v510 = vsel %vm507, %v509, %v505
        %v511 = vmul.f32 %v430, %v510
        %v512 = vrcp.pop %v466
        %v513 = vmul.f32 %v466, %v512
        %v514 = vsub.f32 1.0, %v513
        %v515 = vmul.f32 %v512, %v514
        %v516 = vadd.f32 %v512, %v515
        %vm517 = vweird.f32 %v466
        %vm518 = vweird.f32 %v512
        %vm519 = vmor %vm517, %vm518
        %v520 = vsel %vm519, %v512, %v516
        %v521 = vand.u32 2147483647, %v466
        %vm522 = vcmp.eq.f32.partialorder %v521, 8.507059e+37
        %v523 = vand.u32 %v466, 2147483648
        %v524 = vor.u32 1.1754944e-38, %v523
        %v525 = vsel %vm522, %v524, %v520
        %v526 = vmul.f32 %v431, %v525
        %v527 = vsel %vm432, 1, 0
        %v528 = vsel %vm433, 1, 0
        %v529 = vsel %vm434, 1, 0
        %v530 = vsel %vm435, 1, 0
        %531 = vset.pattern.permute.xlu0 3
        %532 = vperm.xlu0 %531, %v527
        %v533 = vpop.permute.xlu0 %532
        %534 = vset.pattern.permute.xlu0 3
        %535 = vperm.xlu0 %534, %v528
        %v536 = vpop.permute.xlu0 %535
        %537 = vset.pattern.permute.xlu0 3
        %538 = vperm.xlu0 %537, %v529
        %v539 = vpop.permute.xlu0 %538
        %540 = vset.pattern.permute.xlu0 3
        %541 = vperm.xlu0 %540, %v530
        %v542 = vpop.permute.xlu0 %541
        %vm543 = vcmp.eq.s32.totalorder %v533, 1
        %vm544 = vcmp.eq.s32.totalorder %v536, 1
        %vm545 = vcmp.eq.s32.totalorder %v539, 1
        %vm546 = vcmp.eq.s32.totalorder %v542, 1
        %v547 = vsel %vm543, %v481, 0.0
        %v548 = vsel %vm544, %v496, 0.0
        %v549 = vsel %vm545, %v511, 0.0
        %v550 = vsel %vm546, %v526, 0.0
        %551 = vst [vmem:[%s293] sm:$0xff] %v547
        %552 = vst [vmem:[%s293 + $0x8] sm:$0xff] %v548
        %553 = vst [vmem:[%s293 + $0x10] sm:$0xff] %v549
        %554 = vst [vmem:[%s293 + $0x18] sm:$0xff] %v550
        %v555 = vsel %vm543, %v419, 0.0
        %v556 = vsel %vm544, %v420, 0.0
        %v557 = vsel %vm545, %v421, 0.0
        %v558 = vsel %vm546, %v422, 0.0
        %559 = vst [vmem:[%s286] sm:$0xff] %v555
        %560 = vst [vmem:[%s286 + $0x8] sm:$0xff] %v556
        %561 = vst [vmem:[%s286 + $0x10] sm:$0xff] %v557
        %562 = vst [vmem:[%s286 + $0x18] sm:$0xff] %v558
        %s563 = sand.u32 %s87, 1
        %s564 = scalar_lea.sflag [#allocation4], %s563
        %s565 = sand.u32 %s87, 1
        %s566 = smul.addr %s565, 32
        %s567 = scalar_lea.vmem [#allocation7], %s566
        %s568 = sand.u32 %s113, 1
        %s569 = scalar_lea.sflag [#allocation9], %s568
        %s570 = sand.u32 %s113, 1
        %s571 = smul.addr %s570, 32
        %s572 = scalar_lea.vmem [#allocation8], %s571
        // Predicated region
        $region37: #{tpu_custom_call.1} parent=27 // pred_check
          %p573 = pneg %p97
        $region38: #{tpu_custom_call.1} parent=27 // pred_check_branch
          %575 = sbr.rel (%p573) target = $region40
        $region39: #{tpu_custom_call.1} parent=27 // pred_region
          %s576 = smul.u32 4, %s27
          %578 = vsyncadd %s564, 0
          %s579 = smul.addr %s576, 8
          %s580 = scalar_lea.hbm %s2, %s579
          %s581 = sshll.u32 %s567, 4
          %s582 = int_to_ptr.vmem [resolvable:$true] %s581
          %s583 = sshll.u32 %s580, 4
          %s584 = int_to_ptr.hbm [resolvable:$true] %s583
          %589 = dma.vmem_to_hbm [thread:$0]  %s582, 512, %s584, %s564, 128, 128, 8
        $region40: #{tpu_custom_call.1} parent=27 // pred_fallthru
          _
        // Predicated region
        $region41: #{tpu_custom_call.1} parent=27 // pred_check
          %p590 = pneg %p123
        $region42: #{tpu_custom_call.1} parent=27 // pred_check_branch
          %592 = sbr.rel (%p590) target = $region44
        $region43: #{tpu_custom_call.1} parent=27 // pred_region
          %s593 = smul.u32 4, %s27
          %595 = vsyncadd %s569, 0
          %s596 = smul.addr %s593, 8
          %s597 = scalar_lea.hbm %s3, %s596
          %s598 = sshll.u32 %s572, 4
          %s599 = int_to_ptr.vmem [resolvable:$true] %s598
          %s600 = sshll.u32 %s597, 4
          %s601 = int_to_ptr.hbm [resolvable:$true] %s600
          %606 = dma.vmem_to_hbm [thread:$0]  %s599, 512, %s601, %s569, 128, 128, 8
        $region44: #{tpu_custom_call.1} parent=27 // pred_fallthru
          _
      $region28: #{tpu_custom_call.1} parent=5 // pred_fallthru
        _
      %p607 = scmp.le.s32.totalorder 2, %s22
      // Predicated region
      $region45: #{tpu_custom_call.1} parent=5 // pred_check
        %p608 = pneg %p607
      $region46: #{tpu_custom_call.1} parent=5 // pred_check_branch
        %610 = sbr.rel (%p608) target = $region48
      $region47: #{tpu_custom_call.1} parent=5 // pred_region
        %s611 = ssub.s32 %s22, 2
        // Predicated region
        $region49: #{tpu_custom_call.1} parent=47 // pred_check
          %p612 = pneg %p103
        $region50: #{tpu_custom_call.1} parent=47 // pred_check_branch
          %614 = sbr.rel (%p612) target = $region52
        $region51: #{tpu_custom_call.1} parent=47 // pred_region
          %s615 = sand.u32 %s88, 1
          %s616 = scalar_lea.sflag [#allocation4], %s615
          %s617 = sand.u32 %s88, 1
          %s618 = smul.addr %s617, 32
          %s619 = scalar_lea.vmem [#allocation7], %s618
          %621 = dma.done %s616, 512
        $region52: #{tpu_custom_call.1} parent=47 // pred_fallthru
          _
        // Predicated region
        $region53: #{tpu_custom_call.1} parent=47 // pred_check
          %p622 = pneg %p129
        $region54: #{tpu_custom_call.1} parent=47 // pred_check_branch
          %624 = sbr.rel (%p622) target = $region56
        $region55: #{tpu_custom_call.1} parent=47 // pred_region
          %s625 = sand.u32 %s114, 1
          %s626 = scalar_lea.sflag [#allocation9], %s625
          %s627 = sand.u32 %s114, 1
          %s628 = smul.addr %s627, 32
          %s629 = scalar_lea.vmem [#allocation8], %s628
          %631 = dma.done %s626, 512
        $region56: #{tpu_custom_call.1} parent=47 // pred_fallthru
          _
      $region48: #{tpu_custom_call.1} parent=5 // pred_fallthru
        _
    $region6: #{tpu_custom_call.1} parent=1 // loop_footer
      %s26 = sadd.s32 1, %s22
    $region7: #{tpu_custom_call.1} parent=1 // loop_footer_branch
      %21 = sbr.rel target = $region3
    $region8: #{tpu_custom_call.1} parent=1 // loop_exit
      _
    %632 = vsyncpa [#allocation3], 1
    %s633 = scalar_lea.sflag [#allocation3], 1
    %634 = vsyncpa %s633, 1
    %635 = vsyncpa [#allocation6], 1
    %s636 = scalar_lea.sflag [#allocation6], 1
    %637 = vsyncpa %s636, 1
    %638 = vsyncpa [#allocation4], 1
    %s639 = scalar_lea.sflag [#allocation4], 1
    %640 = vsyncpa %s639, 1
    %641 = vsyncpa [#allocation9], 1
    %s642 = scalar_lea.sflag [#allocation9], 1
    %643 = vsyncpa %s642, 1

</llo_original>
